<compile_context>
chip_gen: v7x
topology: tpu7x:2x2x1
jax: 0.10.0
libtpu: 0.0.40
codegen_flags: <defaults>
</compile_context>

<pallas_src>
import functools

import jax
import jax.numpy as jnp
from jax.experimental import pallas as pl
from jax.experimental.pallas import tpu as pltpu

_LANE = 128


def _round_up(x, m):
    return ((x + m - 1) // m) * m


def linear_kernel(w_ref, b_ref, x_ref, o_ref):
    """VPU-only linear layer on a lane-dense batch tile.

    w_ref: SMEM [out*in] f32, row-major flatten of PyTorch [out, in] weight.
    b_ref: SMEM [out]    f32.
    x_ref: VMEM [in,  TB] f32  (batch on lanes).
    o_ref: VMEM [out, TB] f32  (batch on lanes).
    """
    in_f = x_ref.shape[0]
    out_f = o_ref.shape[0]
    x = x_ref[...]                                    # [in_f, TB], loaded once
    rows = []
    for j in range(out_f):                            # static unroll: 6 FMAs total
        acc = x[0:1, :] * w_ref[j * in_f + 0]
        for i in range(1, in_f):
            acc = acc + x[i:i + 1, :] * w_ref[j * in_f + i]
        rows.append(acc + b_ref[j])
    # Single full-tile store (lane-dense, one vst per vreg column group).
    o_ref[...] = jnp.concatenate(rows, axis=0).astype(o_ref.dtype)


@functools.partial(jax.jit, static_argnames=("block_b",))
def linear_nn_forward(x, weight, bias, *, block_b=131072):
    """x: [B, in] f32; weight: [out, in] f32 (PyTorch layout); bias: [out] f32."""
    B, in_f = x.shape
    out_f = weight.shape[0]

    # Batch tile: multiple of 128 lanes; never larger than the padded batch.
    tb = _round_up(min(block_b, _round_up(B, _LANE)), _LANE)
    b_pad = _round_up(B, tb)

    # Lane-dense layout: batch -> lanes; pad batch up to the tile size.
    x_t = jnp.zeros((in_f, b_pad), x.dtype).at[:, :B].set(x.T)
    w_flat = weight.reshape(-1)           # [out*in] row-major; no host transpose

    y_t = pl.pallas_call(
        linear_kernel,
        out_shape=jax.ShapeDtypeStruct((out_f, b_pad), x.dtype),
        grid=(b_pad // tb,),
        in_specs=[
            pl.BlockSpec(memory_space=pltpu.MemorySpace.SMEM),   # weight scalars
            pl.BlockSpec(memory_space=pltpu.MemorySpace.SMEM),   # bias scalars
            pl.BlockSpec((in_f, tb), lambda i: (0, i)),          # x^T tile
        ],
        out_specs=pl.BlockSpec((out_f, tb), lambda i: (0, i)),   # y^T tile
        compiler_params=pltpu.CompilerParams(
            dimension_semantics=("parallel",)),
    )(w_flat, bias, x_t)

    return y_t[:, :B].T


if __name__ == "__main__":
    in_features, out_features = 2, 3
    batch = 8

    key = jax.random.PRNGKey(0)
    kx, kw, kb, kx2 = jax.random.split(key, 4)

    # Deterministic parameter init (mimics nn.Linear uniform bound 1/sqrt(in)).
    bound = 1.0 / (in_features ** 0.5)
    weight = jax.random.uniform(kw, (out_features, in_features),
                                dtype=jnp.float32, minval=-bound, maxval=bound)
    bias = jax.random.uniform(kb, (out_features,),
                              dtype=jnp.float32, minval=-bound, maxval=bound)

    # Benchmark-sized tiny batch: single 128-lane tile, grid=(1,).
    x = jax.random.normal(kx, (batch, in_features), dtype=jnp.float32)
    y = linear_nn_forward(x, weight, bias)
    jax.block_until_ready(y)
    y_ref = x @ weight.T + bias
    assert y.shape == (batch, out_features)
    assert jnp.allclose(y, y_ref, atol=1e-5, rtol=1e-5), "mismatch vs reference (B=8)"

    # Larger, non-multiple-of-128 batch: exercises padding + multi-step grid.
    x2 = jax.random.normal(kx2, (1000, in_features), dtype=jnp.float32)
    y2 = linear_nn_forward(x2, weight, bias, block_b=256)
    jax.block_until_ready(y2)
    y2_ref = x2 @ weight.T + bias
    assert y2.shape == (1000, out_features)
    assert jnp.allclose(y2, y2_ref, atol=1e-5, rtol=1e-5), "mismatch vs reference (B=1000)"

    print("KERNEL_OK")
</pallas_src>

<mosaic_0001>
module attributes {stable_mosaic.version = 11 : i64} {
  func.func @linear_kernel(%arg0: i32, %arg1: memref<6xf32, #tpu.memory_space<smem>>, %arg2: memref<3xf32, #tpu.memory_space<smem>>, %arg3: memref<2x128xf32, #tpu.memory_space<vmem>>, %arg4: memref<3x128xf32, #tpu.memory_space<vmem>>) attributes {dimension_semantics = [#tpu.dimension_semantics<parallel>], iteration_bounds = array<i64: 1>, scalar_prefetch = 0 : i64, scratch_operands = 0 : i64, tpu.core_type = #tpu.core_type<tc>, window_params = [{transform_indices = @transform_0, window_bounds = array<i64: 6>}, {transform_indices = @transform_1, window_bounds = array<i64: 3>}, {transform_indices = @transform_2, window_bounds = array<i64: 2, 128>}, {transform_indices = @transform_3, window_bounds = array<i64: 3, 128>}]} {
    %c0 = arith.constant 0 : index
    %c0_0 = arith.constant 0 : index
    %0 = vector.load %arg3[%c0, %c0_0] : memref<2x128xf32, #tpu.memory_space<vmem>>, vector<2x128xf32>
    %1 = vector.extract_strided_slice %0 {offsets = [0, 0], sizes = [1, 128], strides = [1, 1]} : vector<2x128xf32> to vector<1x128xf32>
    %c0_1 = arith.constant 0 : index
    %2 = memref.load %arg1[%c0_1] : memref<6xf32, #tpu.memory_space<smem>>
    %3 = vector.broadcast %2 : f32 to vector<1x128xf32>
    %4 = arith.mulf %1, %3 : vector<1x128xf32>
    %5 = vector.extract_strided_slice %0 {offsets = [1, 0], sizes = [1, 128], strides = [1, 1]} : vector<2x128xf32> to vector<1x128xf32>
    %c1 = arith.constant 1 : index
    %6 = memref.load %arg1[%c1] : memref<6xf32, #tpu.memory_space<smem>>
    %7 = vector.broadcast %6 : f32 to vector<1x128xf32>
    %8 = arith.mulf %5, %7 : vector<1x128xf32>
    %9 = arith.addf %4, %8 : vector<1x128xf32>
    %c0_2 = arith.constant 0 : index
    %10 = memref.load %arg2[%c0_2] : memref<3xf32, #tpu.memory_space<smem>>
    %11 = vector.broadcast %10 : f32 to vector<1x128xf32>
    %12 = arith.addf %9, %11 : vector<1x128xf32>
    %13 = vector.extract_strided_slice %0 {offsets = [0, 0], sizes = [1, 128], strides = [1, 1]} : vector<2x128xf32> to vector<1x128xf32>
    %c2 = arith.constant 2 : index
    %14 = memref.load %arg1[%c2] : memref<6xf32, #tpu.memory_space<smem>>
    %15 = vector.broadcast %14 : f32 to vector<1x128xf32>
    %16 = arith.mulf %13, %15 : vector<1x128xf32>
    %17 = vector.extract_strided_slice %0 {offsets = [1, 0], sizes = [1, 128], strides = [1, 1]} : vector<2x128xf32> to vector<1x128xf32>
    %c3 = arith.constant 3 : index
    %18 = memref.load %arg1[%c3] : memref<6xf32, #tpu.memory_space<smem>>
    %19 = vector.broadcast %18 : f32 to vector<1x128xf32>
    %20 = arith.mulf %17, %19 : vector<1x128xf32>
    %21 = arith.addf %16, %20 : vector<1x128xf32>
    %c1_3 = arith.constant 1 : index
    %22 = memref.load %arg2[%c1_3] : memref<3xf32, #tpu.memory_space<smem>>
    %23 = vector.broadcast %22 : f32 to vector<1x128xf32>
    %24 = arith.addf %21, %23 : vector<1x128xf32>
    %25 = vector.extract_strided_slice %0 {offsets = [0, 0], sizes = [1, 128], strides = [1, 1]} : vector<2x128xf32> to vector<1x128xf32>
    %c4 = arith.constant 4 : index
    %26 = memref.load %arg1[%c4] : memref<6xf32, #tpu.memory_space<smem>>
    %27 = vector.broadcast %26 : f32 to vector<1x128xf32>
    %28 = arith.mulf %25, %27 : vector<1x128xf32>
    %29 = vector.extract_strided_slice %0 {offsets = [1, 0], sizes = [1, 128], strides = [1, 1]} : vector<2x128xf32> to vector<1x128xf32>
    %c5 = arith.constant 5 : index
    %30 = memref.load %arg1[%c5] : memref<6xf32, #tpu.memory_space<smem>>
    %31 = vector.broadcast %30 : f32 to vector<1x128xf32>
    %32 = arith.mulf %29, %31 : vector<1x128xf32>
    %33 = arith.addf %28, %32 : vector<1x128xf32>
    %c2_4 = arith.constant 2 : index
    %34 = memref.load %arg2[%c2_4] : memref<3xf32, #tpu.memory_space<smem>>
    %35 = vector.broadcast %34 : f32 to vector<1x128xf32>
    %36 = arith.addf %33, %35 : vector<1x128xf32>
    %37 = tpu.concatenate %12, %24, %36 in 0 : vector<1x128xf32>, vector<1x128xf32>, vector<1x128xf32> -> vector<3x128xf32>
    %c0_5 = arith.constant 0 : index
    %c0_6 = arith.constant 0 : index
    %38 = vector.load %arg4[%c0_5, %c0_6] : memref<3x128xf32, #tpu.memory_space<vmem>>, vector<3x128xf32>
    tpu.vector_store %arg4[%c0_5, %c0_6], %37 {strides = array<i32>} : memref<3x128xf32, #tpu.memory_space<vmem>>, vector<3x128xf32>,
    return
  }
  func.func @transform_0(%arg0: i32) -> i32 {
    %c0_i32 = arith.constant 0 : i32
    %c0_i32_0 = arith.constant 0 : i32
    return %c0_i32 : i32
  }
  func.func @transform_1(%arg0: i32) -> i32 {
    %c0_i32 = arith.constant 0 : i32
    %c0_i32_0 = arith.constant 0 : i32
    return %c0_i32 : i32
  }
  func.func @transform_2(%arg0: i32) -> (i32, i32) {
    %c0_i32 = arith.constant 0 : i32
    %c0_i32_0 = arith.constant 0 : i32
    return %c0_i32, %arg0 : i32, i32
  }
  func.func @transform_3(%arg0: i32) -> (i32, i32) {
    %c0_i32 = arith.constant 0 : i32
    %c0_i32_0 = arith.constant 0 : i32
    return %c0_i32, %arg0 : i32, i32
  }
}

</mosaic_0001>

<llo_original>
// kernel: linear_nn_forward.1
$region0: #{linear_nn_forward.1}
  #allocation0 [shape = 'u32[]', space=smem, size = 0x4, offset = 0x4, fixed_abs, tag = 'smem constant byte address 0x4 - core index']
  #allocation1 [shape = 'u32[144,128]{1,0:T(1,128)}', space=vmem, size = 0x12000, scoped, tag = 'internal scratch']
  %s0 = inlined_call_operand.vmem [shape: f32[6], index: 0, kind: input, shape index: {}]
  %s1 = inlined_call_operand.vmem [shape: f32[3], index: 1, kind: input, shape index: {}]
  %s2 = inlined_call_operand.vmem [shape: f32[2,128], index: 2, kind: input, shape index: {}]
  %s3 = inlined_call_operand.vmem [shape: f32[3,128], index: 3, kind: output, shape index: {}]
  %s4 = sld [smem:[#allocation0]]
  $region30: #{linear_nn_forward.1} parent=0
    _
  %s6 = ssub.s32 1, %s4
  %s7 = scalar_select 0, %s6, %s4
  $region1: #{linear_nn_forward.1} parent=0
    #allocation2 [shape = 'u8[512]{0}', space=smem, size = 0x200, scoped, tag = 'input window, operand 0, single buffered']
    #allocation3 [shape = 's32[1]{0}', space=sflag, size = 0x4, scoped, tag = 'scoped memory for linear_nn_forward.1']
    #allocation4 [shape = 'u8[512]{0}', space=smem, size = 0x200, scoped, tag = 'input window, operand 1, single buffered']
    #allocation5 [shape = 's32[1]{0}', space=sflag, size = 0x4, scoped, tag = 'scoped memory for linear_nn_forward.1']
    %8 = vsyncpa [#allocation3], 0
    %9 = vsyncpa [#allocation5], 0
    // Predicated region
    $region2: #{linear_nn_forward.1} parent=1 // pred_check
      _
    $region3: #{linear_nn_forward.1} parent=1 // pred_check_branch
      %11 = sbr.rel (0) target = $region5
    $region4: #{linear_nn_forward.1} parent=1 // pred_region
      %s13 = ssub.s32 16, 16
      %14 = vsyncadd [#allocation3], %s13
      %s16 = sshll.u32 %s0, 4
      %s17 = int_to_ptr.vmem [resolvable:$true] %s16
      %19 = dma.vmem_to_smem %s17, 16, [#allocation2], [#allocation3]
    $region5: #{linear_nn_forward.1} parent=1 // pred_fallthru
      _
    // Predicated region
    $region6: #{linear_nn_forward.1} parent=1 // pred_check
      _
    $region7: #{linear_nn_forward.1} parent=1 // pred_check_branch
      %21 = sbr.rel (0) target = $region9
    $region8: #{linear_nn_forward.1} parent=1 // pred_region
      %s23 = ssub.s32 16, 16
      %24 = vsyncadd [#allocation5], %s23
      %s26 = sshll.u32 %s1, 4
      %s27 = int_to_ptr.vmem [resolvable:$true] %s26
      %29 = dma.vmem_to_smem %s27, 16, [#allocation4], [#allocation5]
    $region9: #{linear_nn_forward.1} parent=1 // pred_fallthru
      _
    // Predicated region
    $region10: #{linear_nn_forward.1} parent=1 // pred_check
      _
    $region11: #{linear_nn_forward.1} parent=1 // pred_check_branch
      %31 = sbr.rel (0) target = $region13
    $region12: #{linear_nn_forward.1} parent=1 // pred_region
      _
    $region13: #{linear_nn_forward.1} parent=1 // pred_fallthru
      _
    // Predicated region
    $region14: #{linear_nn_forward.1} parent=1 // pred_check
      _
    $region15: #{linear_nn_forward.1} parent=1 // pred_check_branch
      %33 = sbr.rel (0) target = $region17
    $region16: #{linear_nn_forward.1} parent=1 // pred_region
      %34 = dma.done [#allocation3], 16
    $region17: #{linear_nn_forward.1} parent=1 // pred_fallthru
      _
    // Predicated region
    $region18: #{linear_nn_forward.1} parent=1 // pred_check
      _
    $region19: #{linear_nn_forward.1} parent=1 // pred_check_branch
      %36 = sbr.rel (0) target = $region21
    $region20: #{linear_nn_forward.1} parent=1 // pred_region
      %37 = dma.done [#allocation5], 16
    $region21: #{linear_nn_forward.1} parent=1 // pred_fallthru
      _
    %38 = sfence
    %v39 = vld [vmem:[%s2] sm:$0x3]
    %s40 = sld [smem:[#allocation2]]
    %v41 = vstv %s40
    %v42 = vmul.f32 %v39, %v41
    %s43 = sld [smem:[#allocation2 + $0x1]]
    %v44 = vstv %s43
    %v45 = vmul.f32 %v39, %v44
    %v47 = vrot.slane %v45, 1
    %v49 = vadd.f32 %v42, %v47
    %s50 = sld [smem:[#allocation4]]
    %v51 = vstv %s50
    %v52 = vadd.f32 %v49, %v51
    %s53 = sld [smem:[#allocation2 + $0x2]]
    %v54 = vstv %s53
    %v55 = vmul.f32 %v39, %v54
    %s56 = sld [smem:[#allocation2 + $0x3]]
    %v57 = vstv %s56
    %v58 = vmul.f32 %v39, %v57
    %v60 = vrot.slane %v58, 1
    %v62 = vadd.f32 %v55, %v60
    %s63 = sld [smem:[#allocation4 + $0x1]]
    %v64 = vstv %s63
    %v65 = vadd.f32 %v62, %v64
    %s66 = sld [smem:[#allocation2 + $0x4]]
    %v67 = vstv %s66
    %v68 = vmul.f32 %v39, %v67
    %s69 = sld [smem:[#allocation2 + $0x5]]
    %v70 = vstv %s69
    %v71 = vmul.f32 %v39, %v70
    %v73 = vrot.slane %v71, 1
    %v75 = vadd.f32 %v68, %v73
    %s76 = sld [smem:[#allocation4 + $0x2]]
    %v77 = vstv %s76
    %v78 = vadd.f32 %v75, %v77
    %v80 = vrot.slane %v65, 7
    %v83 = vrot.slane %v78, 6
    %vm85 = vcmask 1040384
    %v86 = vsel %vm85, %v52, %v80
    %vm87 = vcmask 1041408
    %v88 = vsel %vm87, %v86, %v83
    %89 = vst [vmem:[%s3] sm:$0x7] %v88
    // Predicated region
    $region22: #{linear_nn_forward.1} parent=1 // pred_check
      _
    $region23: #{linear_nn_forward.1} parent=1 // pred_check_branch
      %91 = sbr.rel (0) target = $region25
    $region24: #{linear_nn_forward.1} parent=1 // pred_region
      _
    $region25: #{linear_nn_forward.1} parent=1 // pred_fallthru
      _
    // Predicated region
    $region26: #{linear_nn_forward.1} parent=1 // pred_check
      _
    $region27: #{linear_nn_forward.1} parent=1 // pred_check_branch
      %93 = sbr.rel (0) target = $region29
    $region28: #{linear_nn_forward.1} parent=1 // pred_region
      _
    $region29: #{linear_nn_forward.1} parent=1 // pred_fallthru
      _
    %94 = vsyncpa [#allocation3], 1
    %95 = vsyncpa [#allocation5], 1

</llo_original>
